<compile_context>
chip_gen: v5e
topology: v5e:2x2
jax: 0.10.0
libtpu: 0.0.40
codegen_flags: <defaults>
</compile_context>

<pallas_src>
import functools

import jax
import jax.numpy as jnp
from jax.experimental import pallas as pl
from jax.experimental.pallas import tpu as pltpu

NEG_SLOPE = 0.01          # PyTorch nn.LeakyReLU default negative_slope
_LANES = 128              # parameter-slab width (lane-dense)

# bias-column assignment inside the "vec" block of the parameter slab
_B1A, _B1B, _B2A, _B2B, _B2C, _BF = 0, 1, 2, 3, 4, 5


def _round_up(n, m):
    return ((n + m - 1) // m) * m


def _param_layout(hdim, n_cats):
    """Row offsets of each parameter inside the packed (rows, 128) slab."""
    a8 = lambda n: _round_up(max(n, 1), 8)
    off, r = {}, 0
    for name, nrows in (("w1a", hdim), ("w1b", hdim),
                        ("w2a", hdim), ("w2b", hdim),
                        ("w2c", n_cats),
                        ("vec", hdim),      # bias columns: one bias vector per lane column
                        ("wf1", 1), ("wf2", 1)):
        off[name] = r
        r += a8(nrows)
    return off, r


def pack_params(raw, *, ydim, hdim, n_cats):
    """Pack PyTorch-layout (out,in) weights + biases into one lane-dense f32 slab."""
    (w1a, b1a, w1b, b1b, w2a, b2a, w2b, b2b, w2c, b2c, wf, bf) = raw
    assert max(ydim, hdim, n_cats) <= _LANES
    off, rows = _param_layout(hdim, n_cats)
    s = jnp.zeros((rows, _LANES), jnp.float32)
    s = s.at[off["w1a"]:off["w1a"] + hdim, :ydim].set(w1a)
    s = s.at[off["w1b"]:off["w1b"] + hdim, :hdim].set(w1b)
    s = s.at[off["w2a"]:off["w2a"] + hdim, :ydim].set(w2a)
    s = s.at[off["w2b"]:off["w2b"] + hdim, :hdim].set(w2b)
    s = s.at[off["w2c"]:off["w2c"] + n_cats, :hdim].set(w2c)
    v = off["vec"]
    s = s.at[v:v + hdim, _B1A].set(b1a)
    s = s.at[v:v + hdim, _B1B].set(b1b)
    s = s.at[v:v + hdim, _B2A].set(b2a)
    s = s.at[v:v + hdim, _B2B].set(b2b)
    s = s.at[v:v + n_cats, _B2C].set(b2c)
    s = s.at[v, _BF].set(bf[0])
    s = s.at[off["wf1"], :hdim].set(wf[0, :hdim])
    s = s.at[off["wf2"], :n_cats].set(wf[0, hdim:])
    return s


def _cat_disc_kernel(slab_ref, yt_ref, out_ref, *, ydim, hdim, n_cats, off):
    yt = yt_ref[...]                                     # (ydim, TB), feature-major
    vec = off["vec"]

    def lrelu(x):
        return jnp.maximum(x, NEG_SLOPE * x)

    def bias_col(col, nrows):
        return slab_ref[vec:vec + nrows, col:col + 1]    # (nrows, 1)

    def input_layer(w_off, bcol):
        # K == ydim (tiny): VPU broadcast-FMAs, no MXU round-trip.
        acc = bias_col(bcol, hdim)                       # (hdim, 1) -> broadcasts
        for d in range(ydim):
            w_col = slab_ref[w_off:w_off + hdim, d:d + 1]        # (hdim, 1)
            acc = acc + w_col * yt[d:d + 1, :]                   # (hdim, TB)
        return lrelu(acc)

    def hidden_layer(x, w_off, bcol):
        w = slab_ref[w_off:w_off + hdim, 0:hdim]                 # (hdim, hdim)
        pre = jnp.dot(w, x, preferred_element_type=jnp.float32) + bias_col(bcol, hdim)
        return lrelu(pre)

    # ---- net1: Linear -> LReLU -> Linear -> LReLU ----
    h1 = input_layer(off["w1a"], _B1A)
    h1 = hidden_layer(h1, off["w1b"], _B1B)

    # ---- net2 trunk + categorical head (Softmax over the category axis) ----
    h2 = input_layer(off["w2a"], _B2A)
    h2 = hidden_layer(h2, off["w2b"], _B2B)
    w2c = slab_ref[off["w2c"]:off["w2c"] + n_cats, 0:hdim]       # (n_cats, hdim)
    logits = (jnp.dot(w2c, h2, preferred_element_type=jnp.float32)
              + bias_col(_B2C, n_cats))                          # (n_cats, TB)
    logits = logits - jnp.max(logits, axis=0, keepdims=True)
    e = jnp.exp(logits)
    inv_den = pl.reciprocal(jnp.sum(e, axis=0, keepdims=True), approx=True)
    cats = e * inv_den                                           # (n_cats, TB)

    # ---- final: sigmoid(Linear(concat([net1(y), net2(y)]))), concat-free split ----
    wf1 = slab_ref[off["wf1"]:off["wf1"] + 1, 0:hdim]            # (1, hdim)
    wf2 = slab_ref[off["wf2"]:off["wf2"] + 1, 0:n_cats]          # (1, n_cats)
    bf = slab_ref[vec:vec + 1, _BF:_BF + 1]                      # (1, 1)
    z = (jnp.dot(wf1, h1, preferred_element_type=jnp.float32)
         + jnp.dot(wf2, cats, preferred_element_type=jnp.float32)
         + bf)                                                   # (1, TB), lane-dense
    out_ref[...] = jax.nn.sigmoid(z)


@functools.partial(jax.jit, static_argnames=("ydim", "hdim", "n_cats", "tile_b"))
def cat_discriminator(y, slab, *, ydim, hdim, n_cats, tile_b=512):
    B = y.shape[0]
    assert tile_b % 128 == 0
    tb = min(tile_b, _round_up(max(B, 1), 128))
    b_pad = _round_up(B, tb)
    # Feature-major, zero-padded batch so every tile is a full multiple of 128 lanes.
    yt = jnp.zeros((ydim, b_pad), jnp.float32).at[:, :B].set(y.T.astype(jnp.float32))
    off, _ = _param_layout(hdim, n_cats)
    kernel = functools.partial(_cat_disc_kernel, ydim=ydim, hdim=hdim,
                               n_cats=n_cats, off=off)
    out = pl.pallas_call(
        kernel,
        out_shape=jax.ShapeDtypeStruct((1, b_pad), jnp.float32),
        grid_spec=pltpu.PrefetchScalarGridSpec(
            num_scalar_prefetch=0,
            grid=(b_pad // tb,),
            in_specs=[
                # single packed parameter slab, VMEM-resident across all grid steps
                pl.BlockSpec(slab.shape, lambda i: (0, 0)),
                # batch tile of the (transposed) input
                pl.BlockSpec((ydim, tb), lambda i: (0, i)),
            ],
            out_specs=pl.BlockSpec((1, tb), lambda i: (0, i)),
        ),
        compiler_params=pltpu.CompilerParams(
            dimension_semantics=("parallel",)),   # shard batch tiles over TCs on v7x
    )(slab, yt)
    return out[0, :B].reshape(B, 1)


def init_linear(key, in_dim, out_dim):
    """PyTorch nn.Linear default init; weight kept in PyTorch layout (out, in)."""
    kw, kb = jax.random.split(key)
    bound = 1.0 / (in_dim ** 0.5)
    w = jax.random.uniform(kw, (out_dim, in_dim), jnp.float32, -bound, bound)
    b = jax.random.uniform(kb, (out_dim,), jnp.float32, -bound, bound)
    return w, b


def reference_forward(y, raw):
    (w1a, b1a, w1b, b1b, w2a, b2a, w2b, b2b, w2c, b2c, wf, bf) = raw
    lrelu = lambda x: jnp.where(x >= 0, x, NEG_SLOPE * x)
    h1 = lrelu(y @ w1a.T + b1a)
    h1 = lrelu(h1 @ w1b.T + b1b)
    h2 = lrelu(y @ w2a.T + b2a)
    h2 = lrelu(h2 @ w2b.T + b2b)
    cats = jax.nn.softmax(h2 @ w2c.T + b2c, axis=1)
    z = jnp.concatenate([h1, cats], axis=1) @ wf.T + bf
    return jax.nn.sigmoid(z)


if __name__ == "__main__":
    # Module hyperparameters (pinwheel data is 2-D; defaults n_hidden=1, n_cats=3).
    ydim, hdim, n_cats = 2, 32, 3
    batch = 8

    key = jax.random.PRNGKey(0)
    keys = jax.random.split(key, 7)

    y = jax.random.normal(keys[0], (batch, ydim), jnp.float32)

    # net1: Linear(ydim, hdim) + LReLU, Linear(hdim, hdim) + LReLU
    w1a, b1a = init_linear(keys[1], ydim, hdim)
    w1b, b1b = init_linear(keys[2], hdim, hdim)
    # net2: Linear(ydim, hdim) + LReLU, Linear(hdim, hdim) + LReLU,
    #       Linear(hdim, n_cats) + Softmax(dim=1)
    w2a, b2a = init_linear(keys[3], ydim, hdim)
    w2b, b2b = init_linear(keys[4], hdim, hdim)
    w2c, b2c = init_linear(keys[5], hdim, n_cats)
    # final: Linear(hdim + n_cats, 1)
    wf, bf = init_linear(keys[6], hdim + n_cats, 1)

    raw = (w1a, b1a, w1b, b1b, w2a, b2a, w2b, b2b, w2c, b2c, wf, bf)
    slab = pack_params(raw, ydim=ydim, hdim=hdim, n_cats=n_cats)

    out = cat_discriminator(y, slab, ydim=ydim, hdim=hdim, n_cats=n_cats)
    out = jax.block_until_ready(out)

    ref = reference_forward(y, raw)
    assert out.shape == (batch, 1)
    # approx EUP reciprocal in the softmax denominator -> slightly relaxed tolerance
    assert jnp.allclose(out, ref, atol=2e-4, rtol=2e-4), (out, ref)

    print("KERNEL_OK")
</pallas_src>

<mosaic_0001>
module attributes {stable_mosaic.version = 11 : i64} {
  func.func @_cat_disc_kernel(%arg0: i32, %arg1: memref<184x128xf32, #tpu.memory_space<vmem>>, %arg2: memref<2x128xf32, #tpu.memory_space<vmem>>, %arg3: memref<1x128xf32, #tpu.memory_space<vmem>>) attributes {dimension_semantics = [#tpu.dimension_semantics<parallel>], iteration_bounds = array<i64: 1>, scalar_prefetch = 0 : i64, scratch_operands = 0 : i64, tpu.core_type = #tpu.core_type<tc>, window_params = [{pipeline_mode = #tpu.pipeline_mode<synchronous>, transform_indices = @transform_0, window_bounds = array<i64: 184, 128>}, {transform_indices = @transform_1, window_bounds = array<i64: 2, 128>}, {transform_indices = @transform_2, window_bounds = array<i64: 1, 128>}]} {
    %c0 = arith.constant 0 : index
    %c0_0 = arith.constant 0 : index
    %0 = vector.load %arg2[%c0, %c0_0] : memref<2x128xf32, #tpu.memory_space<vmem>>, vector<2x128xf32>
    %c136 = arith.constant 136 : index
    %c0_1 = arith.constant 0 : index
    %1 = vector.load %arg1[%c136, %c0_1] : memref<184x128xf32, #tpu.memory_space<vmem>>, vector<32x1xf32>
    %c0_2 = arith.constant 0 : index
    %c0_3 = arith.constant 0 : index
    %2 = vector.load %arg1[%c0_2, %c0_3] : memref<184x128xf32, #tpu.memory_space<vmem>>, vector<32x1xf32>
    %3 = vector.extract_strided_slice %0 {offsets = [0, 0], sizes = [1, 128], strides = [1, 1]} : vector<2x128xf32> to vector<1x128xf32>
    %4 = vector.broadcast %2 : vector<32x1xf32> to vector<32x128xf32>
    %5 = vector.broadcast %3 : vector<1x128xf32> to vector<32x128xf32>
    %6 = arith.mulf %4, %5 : vector<32x128xf32>
    %7 = vector.broadcast %1 : vector<32x1xf32> to vector<32x128xf32>
    %8 = arith.addf %7, %6 : vector<32x128xf32>
    %c0_4 = arith.constant 0 : index
    %c1 = arith.constant 1 : index
    %9 = vector.load %arg1[%c0_4, %c1] : memref<184x128xf32, #tpu.memory_space<vmem>>, vector<32x1xf32>
    %10 = vector.extract_strided_slice %0 {offsets = [1, 0], sizes = [1, 128], strides = [1, 1]} : vector<2x128xf32> to vector<1x128xf32>
    %11 = vector.broadcast %9 : vector<32x1xf32> to vector<32x128xf32>
    %12 = vector.broadcast %10 : vector<1x128xf32> to vector<32x128xf32>
    %13 = arith.mulf %11, %12 : vector<32x128xf32>
    %14 = arith.addf %8, %13 : vector<32x128xf32>
    %cst = arith.constant 0.00999999977 : f32
    %15 = vector.broadcast %cst : f32 to vector<32x128xf32>
    %16 = arith.mulf %15, %14 : vector<32x128xf32>
    %17 = arith.maximumf %14, %16 : vector<32x128xf32>
    %c32 = arith.constant 32 : index
    %c0_5 = arith.constant 0 : index
    %18 = vector.load %arg1[%c32, %c0_5] : memref<184x128xf32, #tpu.memory_space<vmem>>, vector<32x32xf32>
    %cst_6 = arith.constant dense<0.000000e+00> : vector<32x128xf32>
    %19 = tpu.matmul %18, %17, %cst_6 {dimension_numbers = #tpu.dot_dimension_numbers<[1], [0], [0], [1], [0, 0, 1, 1], [], []>} : vector<32x32xf32>, vector<32x128xf32>, vector<32x128xf32> -> vector<32x128xf32>
    %c136_7 = arith.constant 136 : index
    %c1_8 = arith.constant 1 : index
    %20 = vector.load %arg1[%c136_7, %c1_8] : memref<184x128xf32, #tpu.memory_space<vmem>>, vector<32x1xf32>
    %21 = vector.broadcast %20 : vector<32x1xf32> to vector<32x128xf32>
    %22 = arith.addf %19, %21 : vector<32x128xf32>
    %cst_9 = arith.constant 0.00999999977 : f32
    %23 = vector.broadcast %cst_9 : f32 to vector<32x128xf32>
    %24 = arith.mulf %23, %22 : vector<32x128xf32>
    %25 = arith.maximumf %22, %24 : vector<32x128xf32>
    %c136_10 = arith.constant 136 : index
    %c2 = arith.constant 2 : index
    %26 = vector.load %arg1[%c136_10, %c2] : memref<184x128xf32, #tpu.memory_space<vmem>>, vector<32x1xf32>
    %c64 = arith.constant 64 : index
    %c0_11 = arith.constant 0 : index
    %27 = vector.load %arg1[%c64, %c0_11] : memref<184x128xf32, #tpu.memory_space<vmem>>, vector<32x1xf32>
    %28 = vector.extract_strided_slice %0 {offsets = [0, 0], sizes = [1, 128], strides = [1, 1]} : vector<2x128xf32> to vector<1x128xf32>
    %29 = vector.broadcast %27 : vector<32x1xf32> to vector<32x128xf32>
    %30 = vector.broadcast %28 : vector<1x128xf32> to vector<32x128xf32>
    %31 = arith.mulf %29, %30 : vector<32x128xf32>
    %32 = vector.broadcast %26 : vector<32x1xf32> to vector<32x128xf32>
    %33 = arith.addf %32, %31 : vector<32x128xf32>
    %c64_12 = arith.constant 64 : index
    %c1_13 = arith.constant 1 : index
    %34 = vector.load %arg1[%c64_12, %c1_13] : memref<184x128xf32, #tpu.memory_space<vmem>>, vector<32x1xf32>
    %35 = vector.extract_strided_slice %0 {offsets = [1, 0], sizes = [1, 128], strides = [1, 1]} : vector<2x128xf32> to vector<1x128xf32>
    %36 = vector.broadcast %34 : vector<32x1xf32> to vector<32x128xf32>
    %37 = vector.broadcast %35 : vector<1x128xf32> to vector<32x128xf32>
    %38 = arith.mulf %36, %37 : vector<32x128xf32>
    %39 = arith.addf %33, %38 : vector<32x128xf32>
    %cst_14 = arith.constant 0.00999999977 : f32
    %40 = vector.broadcast %cst_14 : f32 to vector<32x128xf32>
    %41 = arith.mulf %40, %39 : vector<32x128xf32>
    %42 = arith.maximumf %39, %41 : vector<32x128xf32>
    %c96 = arith.constant 96 : index
    %c0_15 = arith.constant 0 : index
    %43 = vector.load %arg1[%c96, %c0_15] : memref<184x128xf32, #tpu.memory_space<vmem>>, vector<32x32xf32>
    %cst_16 = arith.constant dense<0.000000e+00> : vector<32x128xf32>
    %44 = tpu.matmul %43, %42, %cst_16 {dimension_numbers = #tpu.dot_dimension_numbers<[1], [0], [0], [1], [0, 0, 1, 1], [], []>} : vector<32x32xf32>, vector<32x128xf32>, vector<32x128xf32> -> vector<32x128xf32>
    %c136_17 = arith.constant 136 : index
    %c3 = arith.constant 3 : index
    %45 = vector.load %arg1[%c136_17, %c3] : memref<184x128xf32, #tpu.memory_space<vmem>>, vector<32x1xf32>
    %46 = vector.broadcast %45 : vector<32x1xf32> to vector<32x128xf32>
    %47 = arith.addf %44, %46 : vector<32x128xf32>
    %cst_18 = arith.constant 0.00999999977 : f32
    %48 = vector.broadcast %cst_18 : f32 to vector<32x128xf32>
    %49 = arith.mulf %48, %47 : vector<32x128xf32>
    %50 = arith.maximumf %47, %49 : vector<32x128xf32>
    %c128 = arith.constant 128 : index
    %c0_19 = arith.constant 0 : index
    %51 = vector.load %arg1[%c128, %c0_19] : memref<184x128xf32, #tpu.memory_space<vmem>>, vector<3x32xf32>
    %cst_20 = arith.constant dense<0.000000e+00> : vector<3x128xf32>
    %52 = tpu.matmul %51, %50, %cst_20 {dimension_numbers = #tpu.dot_dimension_numbers<[1], [0], [0], [1], [0, 0, 1, 1], [], []>} : vector<3x32xf32>, vector<32x128xf32>, vector<3x128xf32> -> vector<3x128xf32>
    %c136_21 = arith.constant 136 : index
    %c4 = arith.constant 4 : index
    %53 = vector.load %arg1[%c136_21, %c4] : memref<184x128xf32, #tpu.memory_space<vmem>>, vector<3x1xf32>
    %54 = vector.broadcast %53 : vector<3x1xf32> to vector<3x128xf32>
    %55 = arith.addf %52, %54 : vector<3x128xf32>
    %cst_22 = arith.constant dense<0xFF800000> : vector<128xf32>
    %56 = vector.multi_reduction <maximumf>, %55, %cst_22 [0] : vector<3x128xf32> to vector<128xf32>
    %57 = vector.shape_cast %56 : vector<128xf32> to vector<1x128xf32>
    %58 = vector.broadcast %57 : vector<1x128xf32> to vector<3x128xf32>
    %59 = arith.subf %55, %58 : vector<3x128xf32>
    %60 = math.exp %59 : vector<3x128xf32>
    %cst_23 = arith.constant dense<0.000000e+00> : vector<128xf32>
    %61 = vector.multi_reduction <add>, %60, %cst_23 [0] : vector<3x128xf32> to vector<128xf32>
    %62 = vector.shape_cast %61 : vector<128xf32> to vector<1x128xf32>
    %63 = tpu.reciprocal %62 {approx = true} : vector<1x128xf32> -> vector<1x128xf32>
    %64 = vector.broadcast %63 : vector<1x128xf32> to vector<3x128xf32>
    %65 = arith.mulf %60, %64 : vector<3x128xf32>
    %c168 = arith.constant 168 : index
    %c0_24 = arith.constant 0 : index
    %66 = vector.load %arg1[%c168, %c0_24] : memref<184x128xf32, #tpu.memory_space<vmem>>, vector<1x32xf32>
    %c176 = arith.constant 176 : index
    %c0_25 = arith.constant 0 : index
    %67 = vector.load %arg1[%c176, %c0_25] : memref<184x128xf32, #tpu.memory_space<vmem>>, vector<1x3xf32>
    %c136_26 = arith.constant 136 : index
    %c5 = arith.constant 5 : index
    %68 = vector.load %arg1[%c136_26, %c5] : memref<184x128xf32, #tpu.memory_space<vmem>>, vector<1x1xf32>
    %cst_27 = arith.constant dense<0.000000e+00> : vector<1x128xf32>
    %69 = tpu.matmul %66, %25, %cst_27 {dimension_numbers = #tpu.dot_dimension_numbers<[1], [0], [0], [1], [0, 0, 1, 1], [], []>} : vector<1x32xf32>, vector<32x128xf32>, vector<1x128xf32> -> vector<1x128xf32>
    %cst_28 = arith.constant dense<0.000000e+00> : vector<1x128xf32>
    %70 = tpu.matmul %67, %65, %cst_28 {dimension_numbers = #tpu.dot_dimension_numbers<[1], [0], [0], [1], [0, 0, 1, 1], [], []>} : vector<1x3xf32>, vector<3x128xf32>, vector<1x128xf32> -> vector<1x128xf32>
    %71 = arith.addf %69, %70 : vector<1x128xf32>
    %72 = vector.broadcast %68 : vector<1x1xf32> to vector<1x128xf32>
    %73 = arith.addf %71, %72 : vector<1x128xf32>
    %74 = arith.negf %73 : vector<1x128xf32>
    %75 = math.exp %74 : vector<1x128xf32>
    %cst_29 = arith.constant 1.000000e+00 : f32
    %76 = vector.broadcast %cst_29 : f32 to vector<1x128xf32>
    %77 = arith.addf %76, %75 : vector<1x128xf32>
    %78 = arith.divf %76, %77 : vector<1x128xf32>
    %c0_30 = arith.constant 0 : index
    %c0_31 = arith.constant 0 : index
    %79 = vector.load %arg3[%c0_30, %c0_31] : memref<1x128xf32, #tpu.memory_space<vmem>>, vector<1x128xf32>
    tpu.vector_store %arg3[%c0_30, %c0_31], %78 {strides = array<i32>} : memref<1x128xf32, #tpu.memory_space<vmem>>, vector<1x128xf32>,
    return
  }
  func.func @transform_0(%arg0: i32) -> (i32, i32) {
    %c0_i32 = arith.constant 0 : i32
    %c0_i32_0 = arith.constant 0 : i32
    %c0_i32_1 = arith.constant 0 : i32
    return %c0_i32, %c0_i32_0 : i32, i32
  }
  func.func @transform_1(%arg0: i32) -> (i32, i32) {
    %c0_i32 = arith.constant 0 : i32
    %c0_i32_0 = arith.constant 0 : i32
    return %c0_i32, %arg0 : i32, i32
  }
  func.func @transform_2(%arg0: i32) -> (i32, i32) {
    %c0_i32 = arith.constant 0 : i32
    %c0_i32_0 = arith.constant 0 : i32
    return %c0_i32, %arg0 : i32, i32
  }
}

</mosaic_0001>

<llo_original>
// kernel: cat_discriminator.1
$region0: #{cat_discriminator.1}
  #allocation0 [shape = 'u32[]', space=smem, size = 0x4, offset = 0x4, fixed_abs, tag = 'smem constant byte address 0x4 - core index']
  #allocation1 [shape = 'u32[72,128]{1,0:T(1,128)}', space=vmem, size = 0x9000, scoped, tag = 'internal scratch']
  %s0 = inlined_call_operand.hbm [shape: f32[184,128], index: 0, kind: input, shape index: {}]
  %s1 = inlined_call_operand.vmem [shape: f32[2,128], index: 1, kind: input, shape index: {}]
  %s2 = inlined_call_operand.vmem [shape: f32[1,128], index: 2, kind: output, shape index: {}]
  %s3 = sld [smem:[#allocation0]]
  $region22: #{cat_discriminator.1} parent=0
    _
  %s5 = ssub.s32 1, %s3
  %s6 = scalar_select 0, %s5, %s3
  $region1: #{cat_discriminator.1} parent=0
    #allocation2 [shape = 'u8[94208]{0}', space=vmem, size = 0x17000, scoped, tag = 'input window, operand 0, single buffered']
    #allocation3 [shape = 's32[1]{0}', space=sflag, size = 0x4, scoped, tag = 'scoped memory for cat_discriminator.1']
    %7 = vsyncpa [#allocation3], 0
    // Predicated region
    $region2: #{cat_discriminator.1} parent=1 // pred_check
      _
    $region3: #{cat_discriminator.1} parent=1 // pred_check_branch
      %9 = sbr.rel (0) target = $region5
    $region4: #{cat_discriminator.1} parent=1 // pred_region
      %11 = vsyncadd [#allocation3], 0
      %s12 = sshll.u32 %s0, 4
      %s13 = int_to_ptr.hbm [resolvable:$true] %s12
      %s14 = sshll.u32 [#allocation2], 4
      %s15 = int_to_ptr.vmem [resolvable:$true] %s14
      %20 = dma.hbm_to_vmem [thread:$0]  %s13, 2944, %s15, [#allocation3], 128, 128, 8
    $region5: #{cat_discriminator.1} parent=1 // pred_fallthru
      _
    // Predicated region
    $region6: #{cat_discriminator.1} parent=1 // pred_check
      _
    $region7: #{cat_discriminator.1} parent=1 // pred_check_branch
      %22 = sbr.rel (0) target = $region9
    $region8: #{cat_discriminator.1} parent=1 // pred_region
      _
    $region9: #{cat_discriminator.1} parent=1 // pred_fallthru
      _
    // Predicated region
    $region10: #{cat_discriminator.1} parent=1 // pred_check
      _
    $region11: #{cat_discriminator.1} parent=1 // pred_check_branch
      %24 = sbr.rel (0) target = $region13
    $region12: #{cat_discriminator.1} parent=1 // pred_region
      %26 = dma.done [#allocation3], 2944
    $region13: #{cat_discriminator.1} parent=1 // pred_fallthru
      _
    %v27 = vld [vmem:[%s1] sm:$0x3]
    %v28 = vld [vmem:[#allocation2 + $0x88] sm:$0xff]
    %v29 = vld [vmem:[#allocation2 + $0x90] sm:$0xff]
    %v30 = vld [vmem:[#allocation2 + $0x98] sm:$0xff]
    %v31 = vld [vmem:[#allocation2 + $0xa0] sm:$0xff]
    %v32 = vld [vmem:[#allocation2] sm:$0xff]
    %v33 = vld [vmem:[#allocation2 + $0x8] sm:$0xff]
    %v34 = vld [vmem:[#allocation2 + $0x10] sm:$0xff]
    %v35 = vld [vmem:[#allocation2 + $0x18] sm:$0xff]
    %37 = vset.pattern.permute.xlu0 0
    %38 = vperm.xlu0 %37, %v32
    %v39 = vpop.permute.xlu0 %38
    %42 = vset.pattern.permute.xlu0 0
    %43 = vperm.xlu0 %42, %v33
    %v44 = vpop.permute.xlu0 %43
    %47 = vset.pattern.permute.xlu0 0
    %48 = vperm.xlu0 %47, %v34
    %v49 = vpop.permute.xlu0 %48
    %52 = vset.pattern.permute.xlu0 0
    %53 = vperm.xlu0 %52, %v35
    %v54 = vpop.permute.xlu0 %53
    %v56 = vperm.slane %v27, 0
    %v57 = vmul.f32 %v39, %v56
    %v58 = vmul.f32 %v44, %v56
    %v59 = vmul.f32 %v49, %v56
    %v60 = vmul.f32 %v54, %v56
    %62 = vset.pattern.permute.xlu0 0
    %63 = vperm.xlu0 %62, %v28
    %v64 = vpop.permute.xlu0 %63
    %67 = vset.pattern.permute.xlu0 0
    %68 = vperm.xlu0 %67, %v29
    %v69 = vpop.permute.xlu0 %68
    %72 = vset.pattern.permute.xlu0 0
    %73 = vperm.xlu0 %72, %v30
    %v74 = vpop.permute.xlu0 %73
    %77 = vset.pattern.permute.xlu0 0
    %78 = vperm.xlu0 %77, %v31
    %v79 = vpop.permute.xlu0 %78
    %v81 = vadd.f32 %v64, %v57
    %v82 = vadd.f32 %v69, %v58
    %v83 = vadd.f32 %v74, %v59
    %v84 = vadd.f32 %v79, %v60
    %85 = vset.pattern.permute.xlu0 1
    %86 = vperm.xlu0 %85, %v32
    %v87 = vpop.permute.xlu0 %86
    %89 = vset.pattern.permute.xlu0 1
    %90 = vperm.xlu0 %89, %v33
    %v91 = vpop.permute.xlu0 %90
    %93 = vset.pattern.permute.xlu0 1
    %94 = vperm.xlu0 %93, %v34
    %v95 = vpop.permute.xlu0 %94
    %97 = vset.pattern.permute.xlu0 1
    %98 = vperm.xlu0 %97, %v35
    %v99 = vpop.permute.xlu0 %98
    %v101 = vperm.slane %v27, 1
    %v102 = vmul.f32 %v87, %v101
    %v103 = vmul.f32 %v91, %v101
    %v104 = vmul.f32 %v95, %v101
    %v105 = vmul.f32 %v99, %v101
    %v106 = vadd.f32 %v81, %v102
    %v107 = vadd.f32 %v82, %v103
    %v108 = vadd.f32 %v83, %v104
    %v109 = vadd.f32 %v84, %v105
    %v110 = vmul.f32 %v106, 0.01
    %v111 = vmul.f32 %v107, 0.01
    %v112 = vmul.f32 %v108, 0.01
    %v113 = vmul.f32 %v109, 0.01
    %v114 = vmax.f32 %v106, %v110
    %v115 = vmax.f32 %v107, %v111
    %v116 = vmax.f32 %v108, %v112
    %v117 = vmax.f32 %v109, %v113
    %v118 = vld [vmem:[#allocation2 + $0x20] sm:$0xff]
    %v119 = vld [vmem:[#allocation2 + $0x28] sm:$0xff]
    %v120 = vld [vmem:[#allocation2 + $0x30] sm:$0xff]
    %v121 = vld [vmem:[#allocation2 + $0x38] sm:$0xff]
    %122 = vset.pattern.permute.xlu0 1
    %123 = vperm.xlu0 %122, %v28
    %v124 = vpop.permute.xlu0 %123
    %126 = vset.pattern.permute.xlu0 1
    %127 = vperm.xlu0 %126, %v29
    %v128 = vpop.permute.xlu0 %127
    %130 = vset.pattern.permute.xlu0 1
    %131 = vperm.xlu0 %130, %v30
    %v132 = vpop.permute.xlu0 %131
    %134 = vset.pattern.permute.xlu0 1
    %135 = vperm.xlu0 %134, %v31
    %v136 = vpop.permute.xlu0 %135
    %vm138 = vcmask 261120
    %v140 = vsel %vm138, %v118, 0
    %v143 = vsel %vm138, %v119, 0
    %v146 = vsel %vm138, %v120, 0
    %v149 = vsel %vm138, %v121, 0
    %151 = vmatpush.msra.mxu0 0.0
    %152 = vmatpush.msra.mxu0 0.0
    %153 = vmatpush.msra.mxu0 0.0
    %154 = vmatpush.msra.mxu0 0.0
    %155 = vmatpush.msra.mxu0 0.0
    %156 = vmatpush.msra.mxu0 0.0
    %157 = vmatpush.msra.mxu0 0.0
    %158 = vmatpush.msra.mxu0 0.0
    %159 = vmatpush.msra.mxu0 0.0
    %160 = vmatpush.msra.mxu0 0.0
    %161 = vmatpush.msra.mxu0 0.0
    %162 = vmatpush.msra.mxu0 0.0
    %163 = vmatpush.msra.mxu0 %v117
    %164 = vmatpush.msra.mxu0 %v116
    %165 = vmatpush.msra.mxu0 %v115
    %166 = vmatpush.msra.mxu0 %v114
    %167 = vmatmul.f32.gmra.mxu0 %v140
    %v168 = vpop.f32.mrf.mxu0
    %v169 = vadd.f32 %v124, %v168
    %170 = vmatmul.f32.gmra.mxu0 %v143
    %v171 = vpop.f32.mrf.mxu0
    %v172 = vadd.f32 %v128, %v171
    %173 = vmatmul.f32.gmra.mxu0 %v146
    %v174 = vpop.f32.mrf.mxu0
    %v175 = vadd.f32 %v132, %v174
    %176 = vmatmul.f32.gmra.mxu0 %v149
    %v177 = vpop.f32.mrf.mxu0
    %v178 = vadd.f32 %v136, %v177
    %179 = vdwg.mxu0
    %v180 = vmul.f32 %v169, 0.01
    %v181 = vmul.f32 %v172, 0.01
    %v182 = vmul.f32 %v175, 0.01
    %v183 = vmul.f32 %v178, 0.01
    %v184 = vmax.f32 %v169, %v180
    %v185 = vmax.f32 %v172, %v181
    %v186 = vmax.f32 %v175, %v182
    %v187 = vmax.f32 %v178, %v183
    %v188 = vld [vmem:[#allocation2 + $0x40] sm:$0xff]
    %v189 = vld [vmem:[#allocation2 + $0x48] sm:$0xff]
    %v190 = vld [vmem:[#allocation2 + $0x50] sm:$0xff]
    %v191 = vld [vmem:[#allocation2 + $0x58] sm:$0xff]
    %193 = vset.pattern.permute.xlu0 0
    %194 = vperm.xlu0 %193, %v188
    %v195 = vpop.permute.xlu0 %194
    %198 = vset.pattern.permute.xlu0 0
    %199 = vperm.xlu0 %198, %v189
    %v200 = vpop.permute.xlu0 %199
    %203 = vset.pattern.permute.xlu0 0
    %204 = vperm.xlu0 %203, %v190
    %v205 = vpop.permute.xlu0 %204
    %208 = vset.pattern.permute.xlu0 0
    %209 = vperm.xlu0 %208, %v191
    %v210 = vpop.permute.xlu0 %209
    %v212 = vmul.f32 %v195, %v56
    %v213 = vmul.f32 %v200, %v56
    %v214 = vmul.f32 %v205, %v56
    %v215 = vmul.f32 %v210, %v56
    %216 = vset.pattern.permute.xlu0 2
    %217 = vperm.xlu0 %216, %v28
    %v218 = vpop.permute.xlu0 %217
    %220 = vset.pattern.permute.xlu0 2
    %221 = vperm.xlu0 %220, %v29
    %v222 = vpop.permute.xlu0 %221
    %224 = vset.pattern.permute.xlu0 2
    %225 = vperm.xlu0 %224, %v30
    %v226 = vpop.permute.xlu0 %225
    %228 = vset.pattern.permute.xlu0 2
    %229 = vperm.xlu0 %228, %v31
    %v230 = vpop.permute.xlu0 %229
    %v232 = vadd.f32 %v218, %v212
    %v233 = vadd.f32 %v222, %v213
    %v234 = vadd.f32 %v226, %v214
    %v235 = vadd.f32 %v230, %v215
    %236 = vset.pattern.permute.xlu0 1
    %237 = vperm.xlu0 %236, %v188
    %v238 = vpop.permute.xlu0 %237
    %240 = vset.pattern.permute.xlu0 1
    %241 = vperm.xlu0 %240, %v189
    %v242 = vpop.permute.xlu0 %241
    %244 = vset.pattern.permute.xlu0 1
    %245 = vperm.xlu0 %244, %v190
    %v246 = vpop.permute.xlu0 %245
    %248 = vset.pattern.permute.xlu0 1
    %249 = vperm.xlu0 %248, %v191
    %v250 = vpop.permute.xlu0 %249
    %v252 = vmul.f32 %v238, %v101
    %v253 = vmul.f32 %v242, %v101
    %v254 = vmul.f32 %v246, %v101
    %v255 = vmul.f32 %v250, %v101
    %v256 = vadd.f32 %v232, %v252
    %v257 = vadd.f32 %v233, %v253
    %v258 = vadd.f32 %v234, %v254
    %v259 = vadd.f32 %v235, %v255
    %v260 = vmul.f32 %v256, 0.01
    %v261 = vmul.f32 %v257, 0.01
    %v262 = vmul.f32 %v258, 0.01
    %v263 = vmul.f32 %v259, 0.01
    %v264 = vmax.f32 %v256, %v260
    %v265 = vmax.f32 %v257, %v261
    %v266 = vmax.f32 %v258, %v262
    %v267 = vmax.f32 %v259, %v263
    %v268 = vld [vmem:[#allocation2 + $0x60] sm:$0xff]
    %v269 = vld [vmem:[#allocation2 + $0x68] sm:$0xff]
    %v270 = vld [vmem:[#allocation2 + $0x70] sm:$0xff]
    %v271 = vld [vmem:[#allocation2 + $0x78] sm:$0xff]
    %272 = vset.pattern.permute.xlu0 3
    %273 = vperm.xlu0 %272, %v28
    %v274 = vpop.permute.xlu0 %273
    %276 = vset.pattern.permute.xlu0 3
    %277 = vperm.xlu0 %276, %v29
    %v278 = vpop.permute.xlu0 %277
    %280 = vset.pattern.permute.xlu0 3
    %281 = vperm.xlu0 %280, %v30
    %v282 = vpop.permute.xlu0 %281
    %284 = vset.pattern.permute.xlu0 3
    %285 = vperm.xlu0 %284, %v31
    %v286 = vpop.permute.xlu0 %285
    %v289 = vsel %vm138, %v268, 0
    %v292 = vsel %vm138, %v269, 0
    %v295 = vsel %vm138, %v270, 0
    %v298 = vsel %vm138, %v271, 0
    %300 = vmatpush.msra.mxu0 0.0
    %301 = vmatpush.msra.mxu0 0.0
    %302 = vmatpush.msra.mxu0 0.0
    %303 = vmatpush.msra.mxu0 0.0
    %304 = vmatpush.msra.mxu0 0.0
    %305 = vmatpush.msra.mxu0 0.0
    %306 = vmatpush.msra.mxu0 0.0
    %307 = vmatpush.msra.mxu0 0.0
    %308 = vmatpush.msra.mxu0 0.0
    %309 = vmatpush.msra.mxu0 0.0
    %310 = vmatpush.msra.mxu0 0.0
    %311 = vmatpush.msra.mxu0 0.0
    %312 = vmatpush.msra.mxu0 %v267
    %313 = vmatpush.msra.mxu0 %v266
    %314 = vmatpush.msra.mxu0 %v265
    %315 = vmatpush.msra.mxu0 %v264
    %316 = vmatmul.f32.gmra.mxu0 %v289
    %v317 = vpop.f32.mrf.mxu0
    %v318 = vadd.f32 %v274, %v317
    %319 = vmatmul.f32.gmra.mxu0 %v292
    %v320 = vpop.f32.mrf.mxu0
    %v321 = vadd.f32 %v278, %v320
    %322 = vmatmul.f32.gmra.mxu0 %v295
    %v323 = vpop.f32.mrf.mxu0
    %v324 = vadd.f32 %v282, %v323
    %325 = vmatmul.f32.gmra.mxu0 %v298
    %v326 = vpop.f32.mrf.mxu0
    %v327 = vadd.f32 %v286, %v326
    %328 = vdwg.mxu0
    %v329 = vmul.f32 %v318, 0.01
    %v330 = vmul.f32 %v321, 0.01
    %v331 = vmul.f32 %v324, 0.01
    %v332 = vmul.f32 %v327, 0.01
    %v333 = vmax.f32 %v318, %v329
    %v334 = vmax.f32 %v321, %v330
    %v335 = vmax.f32 %v324, %v331
    %v336 = vmax.f32 %v327, %v332
    %v337 = vld [vmem:[#allocation2 + $0x80] sm:$0x7]
    %v338 = vld [vmem:[#allocation2 + $0x88] sm:$0x7]
    %340 = vset.pattern.permute.xlu0 4
    %341 = vperm.xlu0 %340, %v338
    %v342 = vpop.permute.xlu0 %341
    %v345 = vsel %vm138, %v337, 0
    %347 = vmatpush.msra.mxu0 0.0
    %348 = vmatpush.msra.mxu0 0.0
    %349 = vmatpush.msra.mxu0 0.0
    %350 = vmatpush.msra.mxu0 0.0
    %351 = vmatpush.msra.mxu0 0.0
    %352 = vmatpush.msra.mxu0 0.0
    %353 = vmatpush.msra.mxu0 0.0
    %354 = vmatpush.msra.mxu0 0.0
    %355 = vmatpush.msra.mxu0 0.0
    %356 = vmatpush.msra.mxu0 0.0
    %357 = vmatpush.msra.mxu0 0.0
    %358 = vmatpush.msra.mxu0 0.0
    %359 = vmatpush.msra.mxu0 %v336
    %360 = vmatpush.msra.mxu0 %v335
    %361 = vmatpush.msra.mxu0 %v334
    %362 = vmatpush.msra.mxu0 %v333
    %363 = vmatmul.f32.gmra.mxu0 %v345
    %v364 = vpop.f32.mrf.mxu0
    %v365 = vadd.f32 %v342, %v364
    %366 = vdwg.mxu0
    %vm367 = vcmask 1042432
    %v368 = vsel %vm367, %v365, -inf
    %v369 = vrot.slane %v368, 4
    %v370 = vmax.f32 %v368, %v369
    %v371 = vrot.slane %v370, 2
    %v372 = vmax.f32 %v370, %v371
    %v373 = vrot.slane %v372, 1
    %v374 = vmax.f32 %v372, %v373
    %v375 = vsub.f32 %v365, %v374
    %v376 = vmul.f32 %v375, 1.442695
    %v377 = vpow.pop %v376
    %v378 = vsel %vm367, %v377, 0.0
    %v379 = vrot.slane %v378, 4
    %v380 = vadd.f32 %v378, %v379
    %v381 = vrot.slane %v380, 2
    %v382 = vadd.f32 %v380, %v381
    %v383 = vrot.slane %v382, 1
    %v384 = vadd.f32 %v382, %v383
    %v385 = vrcp.pop %v384
    %v386 = vmul.f32 %v377, %v385
    %v387 = vld [vmem:[#allocation2 + $0xa8] sm:$0x1]
    %v388 = vld [vmem:[#allocation2 + $0xb0] sm:$0x1]
    %v389 = vld [vmem:[#allocation2 + $0x88] sm:$0x1]
    %vm390 = vcmask 23552
    %v392 = vsel %vm390, %v388, 0
    %v395 = vsel %vm367, %v386, 0
    %397 = vmatpush.msra.mxu0 0.0
    %398 = vmatpush.msra.mxu0 0.0
    %399 = vmatpush.msra.mxu0 0.0
    %400 = vmatpush.msra.mxu0 0.0
    %401 = vmatpush.msra.mxu0 0.0
    %402 = vmatpush.msra.mxu0 0.0
    %403 = vmatpush.msra.mxu0 0.0
    %404 = vmatpush.msra.mxu0 0.0
    %405 = vmatpush.msra.mxu0 0.0
    %406 = vmatpush.msra.mxu0 0.0
    %407 = vmatpush.msra.mxu0 0.0
    %408 = vmatpush.msra.mxu0 0.0
    %409 = vmatpush.msra.mxu0 0.0
    %410 = vmatpush.msra.mxu0 0.0
    %411 = vmatpush.msra.mxu0 0.0
    %412 = vmatpush.msra.mxu0 %v395
    %413 = vmatmul.f32.gmra.mxu0 %v392
    %v414 = vpop.f32.mrf.mxu0
    %v415 = vadd.f32 0.0, %v414
    %416 = vdwg.mxu0
    %v418 = vsel %vm138, %v387, 0
    %420 = vmatpush.msra.mxu0 0.0
    %421 = vmatpush.msra.mxu0 0.0
    %422 = vmatpush.msra.mxu0 0.0
    %423 = vmatpush.msra.mxu0 0.0
    %424 = vmatpush.msra.mxu0 0.0
    %425 = vmatpush.msra.mxu0 0.0
    %426 = vmatpush.msra.mxu0 0.0
    %427 = vmatpush.msra.mxu0 0.0
    %428 = vmatpush.msra.mxu0 0.0
    %429 = vmatpush.msra.mxu0 0.0
    %430 = vmatpush.msra.mxu0 0.0
    %431 = vmatpush.msra.mxu0 0.0
    %432 = vmatpush.msra.mxu0 %v187
    %433 = vmatpush.msra.mxu0 %v186
    %434 = vmatpush.msra.mxu0 %v185
    %435 = vmatpush.msra.mxu0 %v184
    %436 = vmatmul.f32.gmra.mxu0 %v418
    %v437 = vpop.f32.mrf.mxu0
    %v438 = vadd.f32 %v415, %v437
    %439 = vdwg.mxu0
    %441 = vset.pattern.permute.xlu0 5
    %442 = vperm.xlu0 %441, %v389
    %v443 = vpop.permute.xlu0 %442
    %v445 = vadd.f32 %v438, %v443
    %v446 = vxor.u32 %v445, 2147483648
    %v447 = vmul.f32 %v446, 1.442695
    %v448 = vpow.pop %v447
    %v449 = vadd.f32 %v448, 1.0
    %v450 = vrcp.pop %v449
    %v451 = vmul.f32 %v449, %v450
    %v452 = vsub.f32 1.0, %v451
    %v453 = vmul.f32 %v450, %v452
    %v454 = vadd.f32 %v450, %v453
    %vm455 = vweird.f32 %v449
    %vm456 = vweird.f32 %v450
    %vm457 = vmor %vm455, %vm456
    %v458 = vsel %vm457, %v450, %v454
    %v459 = vand.u32 2147483647, %v449
    %vm460 = vcmp.eq.f32.partialorder %v459, 8.507059e+37
    %v461 = vand.u32 %v449, 2147483648
    %v462 = vor.u32 1.1754944e-38, %v461
    %v463 = vsel %vm460, %v462, %v458
    %v464 = vmul.f32 1.0, %v463
    %465 = vst [vmem:[%s2] sm:$0x1] %v464
    // Predicated region
    $region14: #{cat_discriminator.1} parent=1 // pred_check
      _
    $region15: #{cat_discriminator.1} parent=1 // pred_check_branch
      %467 = sbr.rel (0) target = $region17
    $region16: #{cat_discriminator.1} parent=1 // pred_region
      _
    $region17: #{cat_discriminator.1} parent=1 // pred_fallthru
      _
    // Predicated region
    $region18: #{cat_discriminator.1} parent=1 // pred_check
      _
    $region19: #{cat_discriminator.1} parent=1 // pred_check_branch
      %469 = sbr.rel (0) target = $region21
    $region20: #{cat_discriminator.1} parent=1 // pred_region
      _
    $region21: #{cat_discriminator.1} parent=1 // pred_fallthru
      _
    %470 = vsyncpa [#allocation3], 1

</llo_original>
